<compile_context>
chip_gen: v5e
topology: v5e:2x2
jax: 0.10.0
libtpu: 0.0.40
codegen_flags: <defaults>
</compile_context>

<pallas_src>
import functools

import jax
import jax.numpy as jnp
from jax import lax
from jax.experimental import pallas as pl
from jax.experimental.pallas import tpu as pltpu


def _round_up(x, m):
    return -(-x // m) * m


def _ce_kernel_single(pred_ref, labels_ref, out_ref, *,
                      n_total, c_total, tile_n, tile_c, mask_rows, mask_cols):
    """Fast path: the whole class axis fits in one chunk (num_c == 1)."""
    i = pl.program_id(0)                                       # row-block index
    x = pred_ref[...].astype(jnp.float32)                      # (tile_n, tile_c)
    labels = labels_ref[...]                                   # (tile_n, 1) int32

    col = lax.broadcasted_iota(jnp.int32, (tile_n, tile_c), 1)
    if mask_cols:
        x = jnp.where(col < c_total, x, -jnp.inf)              # padded class cols

    m = jnp.max(x, axis=-1, keepdims=True)
    l = jnp.sum(jnp.exp(x - m), axis=-1, keepdims=True)
    # Label gather via one-hot lane compare (labels < C, padded cols never fire).
    corr = jnp.sum(jnp.where(col == labels, x, 0.0), axis=-1, keepdims=True)

    per_row = m + jnp.log(l) - corr                            # (tile_n, 1)
    if mask_rows:
        row = lax.broadcasted_iota(jnp.int32, (tile_n, 1), 0) + i * tile_n
        per_row = jnp.where(row < n_total, per_row, 0.0)
    # Single 4-byte partial sum per row block (minimal writeback).
    out_ref[...] = jnp.sum(per_row, axis=0, keepdims=True).reshape(1, 1, 1)


def _ce_kernel_stream(pred_ref, labels_ref, out_ref, m_ref, l_ref, corr_ref, *,
                      n_total, c_total, tile_n, tile_c, mask_rows, mask_cols):
    """Streaming (online logsumexp) path: class axis split into chunks."""
    i = pl.program_id(0)                                       # row block ("parallel")
    c = pl.program_id(1)                                       # class chunk ("arbitrary")
    last_c = pl.num_programs(1) - 1

    @pl.when(c == 0)
    def _():
        m_ref[...] = jnp.full_like(m_ref, -jnp.inf)
        l_ref[...] = jnp.zeros_like(l_ref)
        corr_ref[...] = jnp.zeros_like(corr_ref)

    x = pred_ref[...].astype(jnp.float32)                      # (tile_n, tile_c)
    labels = labels_ref[...]                                   # (tile_n, 1)

    # Global class index of each lane column of this chunk (needed for onehot).
    col = lax.broadcasted_iota(jnp.int32, (tile_n, tile_c), 1) + c * tile_c

    if mask_cols:
        # Only the final class chunk can contain padded columns; gate the
        # full-tile compare+select so interior chunks skip that VPU/temp cost.
        x_m = lax.cond(c == last_c,
                       lambda v: jnp.where(col < c_total, v, -jnp.inf),
                       lambda v: v,
                       x)
    else:
        x_m = x
    # Only x_m is used below (lets the unmasked f32 copy die immediately).

    # Online (streaming) logsumexp update across class chunks.
    m_prev = m_ref[...]
    m_new = jnp.maximum(m_prev, jnp.max(x_m, axis=-1, keepdims=True))
    alpha = jnp.exp(m_prev - m_new)                            # == 0 on first chunk
    p = jnp.exp(x_m - m_new)                                   # masked cols -> 0
    l_ref[...] = alpha * l_ref[...] + jnp.sum(p, axis=-1, keepdims=True)
    m_ref[...] = m_new

    # Label gather on the masked tile: value-identical (onehot only fires on
    # valid columns, where x_m == x).
    corr_ref[...] += jnp.sum(jnp.where(col == labels, x_m, 0.0),
                             axis=-1, keepdims=True)

    @pl.when(c == last_c)
    def _():
        per_row = m_ref[...] + jnp.log(l_ref[...]) - corr_ref[...]   # (tile_n, 1)
        if mask_rows:
            row = lax.broadcasted_iota(jnp.int32, (tile_n, 1), 0) + i * tile_n
            per_row = jnp.where(row < n_total, per_row, 0.0)
        out_ref[...] = jnp.sum(per_row, axis=0, keepdims=True).reshape(1, 1, 1)


def cross_entropy_loss(pred, labels, *, tile_n=None, tile_c=None):
    """pred: [N, C] float (f32/bf16); labels: [N] int. Returns scalar f32 mean loss."""
    N, C = pred.shape
    labels2d = labels.astype(jnp.int32).reshape(N, 1)
    itemsize = jnp.dtype(pred.dtype).itemsize

    # Generation-aware VMEM sizing: v7x has 64 MiB per TensorCore, v5e/v6e 128 MiB.
    try:
        vmem_cap = int(pltpu.get_tpu_info().vmem_capacity_bytes)
    except Exception:
        vmem_cap = 64 * 1024 * 1024            # conservative (v7x-sized) fallback
    if vmem_cap <= 64 * 1024 * 1024:           # v7x-class part
        vmem_budget, vmem_limit, max_c_tile = 14 << 20, 40 << 20, 2048
    else:                                      # v5e / v6e (128 MiB)
        vmem_budget, vmem_limit, max_c_tile = 48 << 20, 96 << 20, 4096

    # Class tile: full C when it fits one chunk, else 128-lane-aligned chunks.
    if tile_c is None:
        tile_c = C if C <= max_c_tile else max_c_tile
    else:
        tile_c = max(128, _round_up(int(tile_c), 128))
        if tile_c >= C:
            tile_c = C
    num_c = -(-C // tile_c)

    # Row tile: as big as the VMEM budget allows (accounting for the 2x-buffered
    # input plus live f32 full-tile temps), rounded to the bf16 packing multiple,
    # and capped so there are >= 2 (even-count) row blocks whenever possible --
    # the row axis is the only "parallel" dim, which is what keeps v7x's second
    # TensorCore busy.
    row_mult = 16
    if tile_n is None:
        per_row_bytes = tile_c * (2 * itemsize + 16)
        vmem_rows = max(row_mult,
                        (vmem_budget // per_row_bytes) // row_mult * row_mult)
        if N <= row_mult:
            tile_n = N
        else:
            blocks = max(2, -(-N // vmem_rows))
            if blocks % 2:
                blocks += 1
            tile_n = min(vmem_rows, _round_up(-(-N // blocks), row_mult))
    else:
        tile_n = max(row_mult, _round_up(int(tile_n), row_mult))
        if tile_n >= N:
            tile_n = N
    num_rows = -(-N // tile_n)

    mask_rows = tile_n * num_rows != N
    mask_cols = tile_c * num_c != C

    common = dict(n_total=N, c_total=C, tile_n=tile_n, tile_c=tile_c,
                  mask_rows=mask_rows, mask_cols=mask_cols)
    cost = pl.CostEstimate(
        flops=5 * N * C,
        transcendentals=N * C,
        bytes_accessed=N * C * itemsize + N * 4 + num_rows * 4)

    if num_c == 1:
        kernel = functools.partial(_ce_kernel_single, **common)
        grid = (num_rows,)
        in_specs = [pl.BlockSpec((tile_n, tile_c), lambda i: (i, 0)),
                    pl.BlockSpec((tile_n, 1), lambda i: (i, 0))]
        out_spec = pl.BlockSpec((1, 1, 1), lambda i: (i, 0, 0))
        scratch = []
        dims = ("parallel",)
    else:
        kernel = functools.partial(_ce_kernel_stream, **common)
        grid = (num_rows, num_c)
        in_specs = [pl.BlockSpec((tile_n, tile_c), lambda i, c: (i, c)),
                    pl.BlockSpec((tile_n, 1), lambda i, c: (i, 0))]
        out_spec = pl.BlockSpec((1, 1, 1), lambda i, c: (i, 0, 0))
        scratch = [pltpu.VMEM((tile_n, 1), jnp.float32),
                   pltpu.VMEM((tile_n, 1), jnp.float32),
                   pltpu.VMEM((tile_n, 1), jnp.float32)]
        dims = ("parallel", "arbitrary")

    block_sums = pl.pallas_call(
        kernel,
        out_shape=jax.ShapeDtypeStruct((num_rows, 1, 1), jnp.float32),
        grid_spec=pltpu.PrefetchScalarGridSpec(
            num_scalar_prefetch=0,
            grid=grid,
            in_specs=in_specs,
            out_specs=out_spec,
            scratch_shapes=scratch),
        compiler_params=pltpu.CompilerParams(
            dimension_semantics=dims,
            vmem_limit_bytes=vmem_limit),
        cost_estimate=cost,
    )(pred, labels2d)

    return jnp.sum(block_sums) / N


def _reference(pred, labels):
    logp = jax.nn.log_softmax(pred.astype(jnp.float32), axis=-1)
    nll = -jnp.take_along_axis(logp, labels.reshape(-1, 1).astype(jnp.int32), axis=-1)
    return jnp.mean(nll)


if __name__ == "__main__":
    key = jax.random.PRNGKey(0)
    k1, k2, k3, k4, k5, k6 = jax.random.split(key, 6)

    # 1) Shapes implied by the module (small batch of logits): fast
    #    single-chunk path, one row block.
    N, C = 8, 32
    pred = jax.random.normal(k1, (N, C), dtype=jnp.float32)
    labels = jax.random.randint(k2, (N,), 0, C, dtype=jnp.int32)
    loss = jax.block_until_ready(cross_entropy_loss(pred, labels))
    ref = jax.block_until_ready(_reference(pred, labels))
    assert jnp.allclose(loss, ref, rtol=1e-5, atol=1e-5), (loss, ref)

    # 2) Explicit small tiles: exercises the 2-D streaming grid, online
    #    logsumexp, the gated (last-chunk-only) column mask and row masking.
    N2, C2 = 37, 300
    pred2 = jax.random.normal(k3, (N2, C2), dtype=jnp.float32)
    labels2 = jax.random.randint(k4, (N2,), 0, C2, dtype=jnp.int32)
    loss2 = jax.block_until_ready(
        cross_entropy_loss(pred2, labels2, tile_n=16, tile_c=128))
    ref2 = jax.block_until_ready(_reference(pred2, labels2))
    assert jnp.allclose(loss2, ref2, rtol=1e-5, atol=1e-5), (loss2, ref2)

    # 3) bf16 inputs (bf16 HBM traffic, f32 math), streaming path, 2 row blocks.
    N3, C3 = 64, 512
    pred3 = jax.random.normal(k5, (N3, C3), dtype=jnp.float32).astype(jnp.bfloat16)
    labels3 = jax.random.randint(k6, (N3,), 0, C3, dtype=jnp.int32)
    loss3 = jax.block_until_ready(cross_entropy_loss(pred3, labels3, tile_c=128))
    ref3 = jax.block_until_ready(_reference(pred3, labels3))
    assert jnp.allclose(loss3, ref3, rtol=1e-4, atol=1e-4), (loss3, ref3)

    print("KERNEL_OK")
</pallas_src>

<mosaic_0001>
module attributes {stable_mosaic.version = 11 : i64} {
  func.func @_ce_kernel_single(%arg0: i32, %arg1: memref<8x32xf32, #tpu.memory_space<vmem>>, %arg2: memref<8x1xi32, #tpu.memory_space<vmem>>, %arg3: memref<1x1x1xf32, #tpu.memory_space<vmem>>) attributes {dimension_semantics = [#tpu.dimension_semantics<parallel>], iteration_bounds = array<i64: 1>, scalar_prefetch = 0 : i64, scratch_operands = 0 : i64, tpu.core_type = #tpu.core_type<tc>, window_params = [{transform_indices = @transform_0, window_bounds = array<i64: 8, 32>}, {transform_indices = @transform_1, window_bounds = array<i64: 8, 1>}, {transform_indices = @transform_2, window_bounds = array<i64: 1, 1, 1>}]} {
    %c0 = arith.constant 0 : index
    %c0_0 = arith.constant 0 : index
    %0 = vector.load %arg1[%c0, %c0_0] : memref<8x32xf32, #tpu.memory_space<vmem>>, vector<8x32xf32>
    %c0_1 = arith.constant 0 : index
    %c0_2 = arith.constant 0 : index
    %1 = vector.load %arg2[%c0_1, %c0_2] : memref<8x1xi32, #tpu.memory_space<vmem>>, vector<8x1xi32>
    %2 = tpu.iota {dimensions = array<i32: 1>} : vector<8x32xi32>
    %cst = arith.constant dense<0xFF800000> : vector<8xf32>
    %3 = vector.multi_reduction <maximumf>, %0, %cst [1] : vector<8x32xf32> to vector<8xf32>
    %4 = vector.shape_cast %3 : vector<8xf32> to vector<8x1xf32>
    %5 = vector.broadcast %4 : vector<8x1xf32> to vector<8x32xf32>
    %6 = arith.subf %0, %5 : vector<8x32xf32>
    %7 = math.exp %6 : vector<8x32xf32>
    %cst_3 = arith.constant dense<0.000000e+00> : vector<8xf32>
    %8 = vector.multi_reduction <add>, %7, %cst_3 [1] : vector<8x32xf32> to vector<8xf32>
    %9 = vector.shape_cast %8 : vector<8xf32> to vector<8x1xf32>
    %10 = vector.broadcast %1 : vector<8x1xi32> to vector<8x32xi32>
    %11 = arith.cmpi eq, %2, %10 : vector<8x32xi32>
    %cst_4 = arith.constant 0.000000e+00 : f32
    %12 = vector.broadcast %cst_4 : f32 to vector<8x32xf32>
    %13 = arith.select %11, %0, %12 : vector<8x32xi1>, vector<8x32xf32>
    %cst_5 = arith.constant dense<0.000000e+00> : vector<8xf32>
    %14 = vector.multi_reduction <add>, %13, %cst_5 [1] : vector<8x32xf32> to vector<8xf32>
    %15 = vector.shape_cast %14 : vector<8xf32> to vector<8x1xf32>
    %16 = math.log %9 : vector<8x1xf32>
    %17 = arith.addf %4, %16 : vector<8x1xf32>
    %18 = arith.subf %17, %15 : vector<8x1xf32>
    %cst_6 = arith.constant dense<0.000000e+00> : vector<1xf32>
    %19 = vector.multi_reduction <add>, %18, %cst_6 [0] : vector<8x1xf32> to vector<1xf32>
    %20 = vector.shape_cast %19 : vector<1xf32> to vector<1x1xf32>
    %21 = vector.shape_cast %20 : vector<1x1xf32> to vector<1x1x1xf32>
    %c0_7 = arith.constant 0 : index
    %c0_8 = arith.constant 0 : index
    %c0_9 = arith.constant 0 : index
    %22 = vector.load %arg3[%c0_7, %c0_8, %c0_9] : memref<1x1x1xf32, #tpu.memory_space<vmem>>, vector<1x1x1xf32>
    tpu.vector_store %arg3[%c0_7, %c0_8, %c0_9], %21 {strides = array<i32>} : memref<1x1x1xf32, #tpu.memory_space<vmem>>, vector<1x1x1xf32>,
    return
  }
  func.func @transform_0(%arg0: i32) -> (i32, i32) {
    %c0_i32 = arith.constant 0 : i32
    %c0_i32_0 = arith.constant 0 : i32
    return %arg0, %c0_i32 : i32, i32
  }
  func.func @transform_1(%arg0: i32) -> (i32, i32) {
    %c0_i32 = arith.constant 0 : i32
    %c0_i32_0 = arith.constant 0 : i32
    return %arg0, %c0_i32 : i32, i32
  }
  func.func @transform_2(%arg0: i32) -> (i32, i32, i32) {
    %c0_i32 = arith.constant 0 : i32
    %c0_i32_0 = arith.constant 0 : i32
    %c0_i32_1 = arith.constant 0 : i32
    return %arg0, %c0_i32, %c0_i32_0 : i32, i32, i32
  }
}

</mosaic_0001>

<llo_original>
// kernel: tpu_custom_call.1
$region0: #{tpu_custom_call.1}
  #allocation0 [shape = 'u32[]', space=smem, size = 0x4, offset = 0x4, fixed_abs, tag = 'smem constant byte address 0x4 - core index']
  #allocation1 [shape = 'u32[72,128]{1,0:T(1,128)}', space=vmem, size = 0x9000, scoped, tag = 'internal scratch']
  %s0 = inlined_call_operand.vmem [shape: f32[8,32], index: 0, kind: input, shape index: {}]
  %s1 = inlined_call_operand.vmem [shape: s32[8,1], index: 1, kind: input, shape index: {}]
  %s2 = inlined_call_operand.hbm [shape: f32[1,1,1], index: 2, kind: output, shape index: {}]
  %s3 = sld [smem:[#allocation0]]
  $region18: #{tpu_custom_call.1} parent=0
    _
  %s5 = ssub.s32 1, %s3
  %s6 = scalar_select 0, %s5, %s3
  $region1: #{tpu_custom_call.1} parent=0
    #allocation2 [shape = 'u8[512]{0}', space=vmem, size = 0x400, scoped, tag = 'output window, operand 0, single buffered']
    #allocation3 [shape = 's32[1]{0}', space=sflag, size = 0x4, scoped, tag = 'scoped memory for tpu_custom_call.1']
    %7 = vsyncpa [#allocation3], 0
    // Predicated region
    $region2: #{tpu_custom_call.1} parent=1 // pred_check
      _
    $region3: #{tpu_custom_call.1} parent=1 // pred_check_branch
      %9 = sbr.rel (0) target = $region5
    $region4: #{tpu_custom_call.1} parent=1 // pred_region
      _
    $region5: #{tpu_custom_call.1} parent=1 // pred_fallthru
      _
    // Predicated region
    $region6: #{tpu_custom_call.1} parent=1 // pred_check
      _
    $region7: #{tpu_custom_call.1} parent=1 // pred_check_branch
      %11 = sbr.rel (0) target = $region9
    $region8: #{tpu_custom_call.1} parent=1 // pred_region
      _
    $region9: #{tpu_custom_call.1} parent=1 // pred_fallthru
      _
    %v12 = vld [vmem:[%s0] sm:$0xff]
    %v13 = vld [vmem:[%s1] sm:$0xff]
    %v14 = vlaneseq
    %v15 = vand.u32 %v14, 127
    %vm16 = vcmask 261120
    %v17 = vsel %vm16, %v12, -inf
    %18 = vmax.xlane.f32.xlu0 %v17
    %v19 = vpop.xlane.xlu0 %18
    %v20 = vsub.f32 %v12, %v19
    %v21 = vmul.f32 %v20, 1.442695
    %v22 = vpow.pop %v21
    %v23 = vsel %vm16, %v22, 0.0
    %24 = vadd.xlane.f32.xlu0 %v23
    %v25 = vpop.xlane.xlu0 %24
    %26 = vset.pattern.permute.xlu0 0
    %27 = vperm.xlu0 %26, %v13
    %v28 = vpop.permute.xlu0 %27
    %vm29 = vcmp.eq.s32.totalorder %v15, %v28
    %v30 = vsel %vm29, %v12, 0.0
    %v31 = vsel %vm16, %v30, 0.0
    %32 = vadd.xlane.f32.xlu0 %v31
    %v33 = vpop.xlane.xlu0 %32
    %v34 = vlog2.pop %v25
    %v35 = vmul.f32 %v34, 0.6931472
    %v36 = vadd.f32 %v19, %v35
    %v37 = vsub.f32 %v36, %v33
    %v38 = vrot.slane %v37, 4
    %v39 = vadd.f32 %v37, %v38
    %v40 = vrot.slane %v39, 2
    %v41 = vadd.f32 %v39, %v40
    %v42 = vrot.slane %v41, 1
    %v43 = vadd.f32 %v41, %v42
    %vm44 = vcmask 0
    %45 = vst.msk [vmem:[#allocation2] sm:$0x1] %vm44, %v43
    // Predicated region
    $region10: #{tpu_custom_call.1} parent=1 // pred_check
      _
    $region11: #{tpu_custom_call.1} parent=1 // pred_check_branch
      %47 = sbr.rel (0) target = $region13
    $region12: #{tpu_custom_call.1} parent=1 // pred_region
      %49 = vsyncadd [#allocation3], 0
      %s51 = sshll.u32 [#allocation2], 4
      %s52 = int_to_ptr.vmem [resolvable:$true] %s51
      %s53 = sshll.u32 %s2, 4
      %s54 = int_to_ptr.hbm [resolvable:$true] %s53
      %56 = dma.vmem_to_hbm [thread:$0]  %s52, 16, %s54, [#allocation3]
    $region13: #{tpu_custom_call.1} parent=1 // pred_fallthru
      _
    // Predicated region
    $region14: #{tpu_custom_call.1} parent=1 // pred_check
      _
    $region15: #{tpu_custom_call.1} parent=1 // pred_check_branch
      %58 = sbr.rel (0) target = $region17
    $region16: #{tpu_custom_call.1} parent=1 // pred_region
      %60 = dma.done [#allocation3], 16
    $region17: #{tpu_custom_call.1} parent=1 // pred_fallthru
      _
    %61 = vsyncpa [#allocation3], 1

</llo_original>
